<compile_context>
chip_gen: v7x
topology: tpu7x:2x2x1
jax: 0.10.0
libtpu: 0.0.40
codegen_flags: <defaults>
</compile_context>

<pallas_src>
import jax
import jax.numpy as jnp
from jax.experimental import pallas as pl
from jax.experimental.pallas import tpu as pltpu


def _round_up(x, m):
    return ((x + m - 1) // m) * m


def _vmem_capacity_bytes():
    try:
        info = pltpu.get_tpu_info()
        cap = int(getattr(info, "vmem_capacity_bytes", 0) or 0)
        if cap > 0:
            return cap
    except Exception:
        pass
    return 64 * 1024 * 1024  # conservative: v7x per-TensorCore VMEM


def _vmem_need(tm, tn, Kp):
    # Double-buffered bf16 xa & W1 tiles, f32 accumulator, padded b1/w2/out tiles.
    return (2 * tm * Kp * 2          # xa  (2 bufs, bf16)
            + 2 * Kp * tn * 2        # W1  (2 bufs, bf16)
            + tm * tn * 4            # f32 accumulator scratch
            + 2 * 2 * 8 * tn * 4     # b1 + w2 rows (2 bufs each, 8-sublane pad)
            + 2 * tm * 128 * 4)      # out (2 bufs, lane pad)


def _choose_tiles(Bp16, Kp, Np, budget):
    tm_cands = sorted({min(Bp16, c) for c in (2048, 1024, 512, 256, 128, 64, 32, 16)},
                      reverse=True)
    tn_divs = [d for d in range(Np, 0, -128) if Np % d == 0]

    # Phase 1: W1 fully resident (tn == Np) -> W1 is read from HBM exactly once.
    for tm in tm_cands:
        if _vmem_need(tm, Np, Kp) <= budget:
            if pl.cdiv(Bp16, tm) == 1 and Bp16 >= 32:
                half = _round_up(pl.cdiv(Bp16, 2), 16)
                if _vmem_need(half, Np, Kp) <= budget:
                    tm = half  # >=2 batch tiles keeps both v7x TensorCores busy
            return tm, Np
    # Phase 2: stream W1 over ndh tiles. Largest tm first (W1 is re-streamed
    # once per batch tile), then the largest divisor tile of Np that fits.
    for tm in tm_cands:
        for tn in tn_divs:
            if _vmem_need(tm, tn, Kp) <= budget:
                return tm, tn
    return 16, 128


def critic_kernel(xa_ref, w1_ref, b1_ref, w2_ref, o_ref, acc_ref):
    n = pl.program_id(2)

    @pl.when(n == 0)
    def _init():
        acc_ref[...] = jnp.zeros_like(acc_ref)

    # fc1 tile: (tm, Kp) bf16 @ (Kp, tn) bf16 -> f32 (tm, tn) on the MXU.
    h = jnp.dot(xa_ref[...], w1_ref[...], preferred_element_type=jnp.float32)
    h = h + b1_ref[...]                  # (1, tn) broadcasts over batch rows
    h = jnp.maximum(h, 0.2 * h)          # LeakyReLU(0.2)

    # fc2 (N=1): per-lane partials on the VPU; cross-lane reduce deferred to the
    # last ndh tile (one XLU reduce per (group, batch tile)).
    acc_ref[...] += h * w2_ref[...]

    @pl.when(n == pl.num_programs(2) - 1)
    def _finish():
        o_ref[...] = jnp.sum(acc_ref[...], axis=-1, keepdims=True).astype(o_ref.dtype)


def mlp_critic(x, att, w1x, w1a, b1, w2, b2, *, tm=None, tn=None):
    """Forward of MLP_CRITIC. Returns (B, 1) float32."""
    B = x.shape[0]
    K = x.shape[1] + att.shape[1]
    ndh = w1x.shape[1]

    # --- wrapper-side layout plumbing (cheap XLA ops) ---------------------
    xa = jnp.concatenate([x, att], axis=1)            # (B, K)
    w1 = jnp.concatenate([w1x, w1a], axis=0)          # (K, ndh)

    Kp = _round_up(K, 128)
    Np = _round_up(ndh, 128)
    Bp16 = _round_up(B, 16)                           # bf16: 16 sublanes / vreg

    cap = _vmem_capacity_bytes()
    budget = int(0.70 * cap)

    auto_tm, auto_tn = _choose_tiles(Bp16, Kp, Np, budget)
    tm = auto_tm if tm is None else _round_up(min(tm, Bp16), 16)
    tn = auto_tn if tn is None else tn
    assert tn % 128 == 0 and Np % tn == 0, "tn must be a 128-multiple divisor of padded ndh"

    nb = pl.cdiv(Bp16, tm)
    Bp = nb * tm
    nt = Np // tn

    # v7x: with a single batch tile, split the ndh reduction into 2 parallel
    # groups (partial outputs summed in the wrapper) so both TensorCores work.
    if nb == 1 and nt >= 2 and nt % 2 == 0:
        G, npg = 2, nt // 2
    else:
        G, npg = 1, nt

    # Zero padding keeps the math exact (padded K / ndh / batch rows contribute
    # nothing; padded batch rows are sliced off at the end).
    xa = jnp.pad(xa, ((0, Bp - B), (0, Kp - K))).astype(jnp.bfloat16)
    w1p = jnp.pad(w1, ((0, Kp - K), (0, Np - ndh))).astype(jnp.bfloat16)
    b1p = jnp.pad(jnp.asarray(b1, jnp.float32).reshape(1, -1), ((0, 0), (0, Np - ndh)))
    w2p = jnp.pad(jnp.asarray(w2, jnp.float32).reshape(1, -1), ((0, 0), (0, Np - ndh)))

    need = _vmem_need(tm, tn, Kp)
    vmem_limit = int(min(0.8 * cap, max(8 << 20, 2 * need)))
    vmem_limit = min(max(vmem_limit, need + (1 << 20)), int(0.9 * cap))

    w1_passes = 1 if nt == 1 else nb                  # W1 loaded once per batch tile
    cost = pl.CostEstimate(
        flops=int(2 * Bp * Kp * Np + 4 * Bp * Np),
        transcendentals=0,
        bytes_accessed=int(Bp * Kp * 2 + w1_passes * Kp * Np * 2
                           + w1_passes * 2 * Np * 4 + G * Bp * 4),
    )

    grid = (G, nb, npg)

    out = pl.pallas_call(
        critic_kernel,
        out_shape=jax.ShapeDtypeStruct((G, Bp, 1), jnp.float32),
        grid_spec=pltpu.PrefetchScalarGridSpec(
            num_scalar_prefetch=0,
            grid=grid,
            in_specs=[
                pl.BlockSpec((tm, Kp), lambda g, i, n: (i, 0)),            # xa
                pl.BlockSpec((Kp, tn), lambda g, i, n: (0, g * npg + n)),  # W1
                pl.BlockSpec((1, tn), lambda g, i, n: (0, g * npg + n)),   # b1
                pl.BlockSpec((1, tn), lambda g, i, n: (0, g * npg + n)),   # w2 row
            ],
            out_specs=pl.BlockSpec((None, tm, 1), lambda g, i, n: (g, i, 0)),
            scratch_shapes=[pltpu.VMEM((tm, tn), jnp.float32)],
        ),
        compiler_params=pltpu.CompilerParams(
            dimension_semantics=("parallel", "parallel", "arbitrary"),
            vmem_limit_bytes=vmem_limit,
        ),
        cost_estimate=cost,
    )(xa, w1p, b1p, w2p)

    b2s = jnp.asarray(b2, jnp.float32).reshape(1, 1)
    return out.sum(axis=0)[:B] + b2s


def init_params(key, res_size, att_size, ndh):
    # weights_init: Linear weights ~ N(0, 0.02), biases = 0.
    k1, k2 = jax.random.split(key, 2)
    w1 = 0.02 * jax.random.normal(k1, (res_size + att_size, ndh), jnp.float32)
    w1x, w1a = w1[:res_size], w1[res_size:]
    b1 = jnp.zeros((1, ndh), jnp.float32)
    w2 = 0.02 * jax.random.normal(k2, (ndh, 1), jnp.float32)
    b2 = jnp.zeros((1, 1), jnp.float32)
    return w1x, w1a, b1, w2, b2


if __name__ == "__main__":
    key = jax.random.PRNGKey(0)

    def reference(x, att, w1x, w1a, b1, w2, b2):
        h = jnp.concatenate([x, att], axis=1) @ jnp.concatenate([w1x, w1a], axis=0) + b1
        h = jnp.maximum(h, 0.2 * h)
        return h @ w2 + b2

    def run_case(k, B, RES, ATT, NDH, **kw):
        kx, ka, kp = jax.random.split(k, 3)
        x = jax.random.normal(kx, (B, RES), jnp.float32)
        att = jax.random.normal(ka, (B, ATT), jnp.float32)
        w1x, w1a, b1, w2, b2 = init_params(kp, RES, ATT, NDH)
        out = jax.block_until_ready(mlp_critic(x, att, w1x, w1a, b1, w2, b2, **kw))
        ref = reference(x, att, w1x, w1a, b1, w2, b2)
        assert out.shape == (B, 1)
        # bf16 streaming of x/att/W1 (f32 accumulation) -> slightly looser tolerance.
        assert jnp.allclose(out, ref, atol=3e-3, rtol=2e-2), (
            float(jnp.max(jnp.abs(out - ref))))

    k1, k2, k3 = jax.random.split(key, 3)
    # 1) default auto-tiled path (W1 resident, single small batch tile).
    run_case(k1, B=8, RES=32, ATT=16, NDH=64)
    # 2) forced W1 streaming with one batch tile -> 2 parallel ndh groups.
    run_case(k2, B=8, RES=32, ATT=16, NDH=512, tn=128)
    # 3) forced multi-batch-tile streaming path (reduction over 4 ndh tiles).
    run_case(k3, B=40, RES=32, ATT=16, NDH=512, tm=16, tn=128)

    print("KERNEL_OK")
</pallas_src>

<mosaic_0001>
module attributes {stable_mosaic.version = 11 : i64} {
  func.func @critic_kernel(%arg0: i32, %arg1: i32, %arg2: i32, %arg3: memref<16x128xbf16, #tpu.memory_space<vmem>>, %arg4: memref<128x128xbf16, #tpu.memory_space<vmem>>, %arg5: memref<1x128xf32, #tpu.memory_space<vmem>>, %arg6: memref<1x128xf32, #tpu.memory_space<vmem>>, %arg7: memref<1x16x1xf32, #tpu.memory_space<vmem>>, %arg8: memref<16x128xf32, #tpu.memory_space<vmem>>) attributes {dimension_semantics = [#tpu.dimension_semantics<parallel>, #tpu.dimension_semantics<parallel>, #tpu.dimension_semantics<arbitrary>], iteration_bounds = array<i64: 1, 1, 1>, scalar_prefetch = 0 : i64, scratch_operands = 1 : i64, tpu.core_type = #tpu.core_type<tc>, window_params = [{transform_indices = @transform_0, window_bounds = array<i64: 16, 128>}, {transform_indices = @transform_1, window_bounds = array<i64: 128, 128>}, {transform_indices = @transform_2, window_bounds = array<i64: 1, 128>}, {transform_indices = @transform_3, window_bounds = array<i64: 1, 128>}, {transform_indices = @transform_4, window_bounds = array<i64: 1, 16, 1>}]} {
    %c0_i32 = arith.constant 0 : i32
    %0 = arith.cmpi eq, %arg2, %c0_i32 : i32
    %1 = arith.extui %0 : i1 to i32
    %c0_i32_0 = arith.constant 0 : i32
    %2 = arith.cmpi ne, %1, %c0_i32_0 : i32
    scf.if %2 {
      %cst_15 = arith.constant 0.000000e+00 : f32
      %21 = vector.broadcast %cst_15 : f32 to vector<16x128xf32>
      %c0_16 = arith.constant 0 : index
      %c0_17 = arith.constant 0 : index
      %22 = vector.load %arg8[%c0_16, %c0_17] : memref<16x128xf32, #tpu.memory_space<vmem>>, vector<16x128xf32>
      tpu.vector_store %arg8[%c0_16, %c0_17], %21 {strides = array<i32>} : memref<16x128xf32, #tpu.memory_space<vmem>>, vector<16x128xf32>,
    } else {
    }
    %c0 = arith.constant 0 : index
    %c0_1 = arith.constant 0 : index
    %3 = vector.load %arg3[%c0, %c0_1] : memref<16x128xbf16, #tpu.memory_space<vmem>>, vector<16x128xbf16>
    %c0_2 = arith.constant 0 : index
    %c0_3 = arith.constant 0 : index
    %4 = vector.load %arg4[%c0_2, %c0_3] : memref<128x128xbf16, #tpu.memory_space<vmem>>, vector<128x128xbf16>
    %cst = arith.constant dense<0.000000e+00> : vector<16x128xf32>
    %5 = tpu.matmul %3, %4, %cst {dimension_numbers = #tpu.dot_dimension_numbers<[1], [0], [0], [1], [0, 0, 1, 1], [], []>} : vector<16x128xbf16>, vector<128x128xbf16>, vector<16x128xf32> -> vector<16x128xf32>
    %c0_4 = arith.constant 0 : index
    %c0_5 = arith.constant 0 : index
    %6 = vector.load %arg5[%c0_4, %c0_5] : memref<1x128xf32, #tpu.memory_space<vmem>>, vector<1x128xf32>
    %7 = vector.broadcast %6 : vector<1x128xf32> to vector<16x128xf32>
    %8 = arith.addf %5, %7 : vector<16x128xf32>
    %cst_6 = arith.constant 2.000000e-01 : f32
    %9 = vector.broadcast %cst_6 : f32 to vector<16x128xf32>
    %10 = arith.mulf %9, %8 : vector<16x128xf32>
    %11 = arith.maximumf %8, %10 : vector<16x128xf32>
    %c0_7 = arith.constant 0 : index
    %c0_8 = arith.constant 0 : index
    %12 = vector.load %arg8[%c0_7, %c0_8] : memref<16x128xf32, #tpu.memory_space<vmem>>, vector<16x128xf32>
    %c0_9 = arith.constant 0 : index
    %c0_10 = arith.constant 0 : index
    %13 = vector.load %arg6[%c0_9, %c0_10] : memref<1x128xf32, #tpu.memory_space<vmem>>, vector<1x128xf32>
    %14 = vector.broadcast %13 : vector<1x128xf32> to vector<16x128xf32>
    %15 = arith.mulf %11, %14 : vector<16x128xf32>
    %16 = arith.addf %12, %15 : vector<16x128xf32>
    %c0_11 = arith.constant 0 : index
    %c0_12 = arith.constant 0 : index
    %17 = vector.load %arg8[%c0_11, %c0_12] : memref<16x128xf32, #tpu.memory_space<vmem>>, vector<16x128xf32>
    tpu.vector_store %arg8[%c0_11, %c0_12], %16 {strides = array<i32>} : memref<16x128xf32, #tpu.memory_space<vmem>>, vector<16x128xf32>,
    %c0_i32_13 = arith.constant 0 : i32
    %18 = arith.cmpi eq, %arg2, %c0_i32_13 : i32
    %19 = arith.extui %18 : i1 to i32
    %c0_i32_14 = arith.constant 0 : i32
    %20 = arith.cmpi ne, %19, %c0_i32_14 : i32
    scf.if %20 {
      %c0_15 = arith.constant 0 : index
      %c0_16 = arith.constant 0 : index
      %21 = vector.load %arg8[%c0_15, %c0_16] : memref<16x128xf32, #tpu.memory_space<vmem>>, vector<16x128xf32>
      %cst_17 = arith.constant dense<0.000000e+00> : vector<16xf32>
      %22 = vector.multi_reduction <add>, %21, %cst_17 [1] : vector<16x128xf32> to vector<16xf32>
      %23 = vector.shape_cast %22 : vector<16xf32> to vector<16x1xf32>
      %c0_18 = arith.constant 0 : index
      %c0_19 = arith.constant 0 : index
      %c0_20 = arith.constant 0 : index
      %24 = vector.load %arg7[%c0_18, %c0_19, %c0_20] : memref<1x16x1xf32, #tpu.memory_space<vmem>>, vector<1x16x1xf32>
      %25 = vector.shape_cast %24 : vector<1x16x1xf32> to vector<16x1xf32>
      %26 = vector.shape_cast %23 : vector<16x1xf32> to vector<1x16x1xf32>
      tpu.vector_store %arg7[%c0_18, %c0_19, %c0_20], %26 {strides = array<i32>} : memref<1x16x1xf32, #tpu.memory_space<vmem>>, vector<1x16x1xf32>,
    } else {
    }
    return
  }
  func.func @transform_0(%arg0: i32, %arg1: i32, %arg2: i32) -> (i32, i32) {
    %c0_i32 = arith.constant 0 : i32
    %c0_i32_0 = arith.constant 0 : i32
    return %arg1, %c0_i32 : i32, i32
  }
  func.func @transform_1(%arg0: i32, %arg1: i32, %arg2: i32) -> (i32, i32) {
    %c1_i32 = arith.constant 1 : i32
    %0 = arith.muli %arg0, %c1_i32 : i32
    %1 = arith.addi %0, %arg2 : i32
    %c0_i32 = arith.constant 0 : i32
    %c0_i32_0 = arith.constant 0 : i32
    return %c0_i32, %1 : i32, i32
  }
  func.func @transform_2(%arg0: i32, %arg1: i32, %arg2: i32) -> (i32, i32) {
    %c1_i32 = arith.constant 1 : i32
    %0 = arith.muli %arg0, %c1_i32 : i32
    %1 = arith.addi %0, %arg2 : i32
    %c0_i32 = arith.constant 0 : i32
    %c0_i32_0 = arith.constant 0 : i32
    return %c0_i32, %1 : i32, i32
  }
  func.func @transform_3(%arg0: i32, %arg1: i32, %arg2: i32) -> (i32, i32) {
    %c1_i32 = arith.constant 1 : i32
    %0 = arith.muli %arg0, %c1_i32 : i32
    %1 = arith.addi %0, %arg2 : i32
    %c0_i32 = arith.constant 0 : i32
    %c0_i32_0 = arith.constant 0 : i32
    return %c0_i32, %1 : i32, i32
  }
  func.func @transform_4(%arg0: i32, %arg1: i32, %arg2: i32) -> (i32, i32, i32) {
    %c0_i32 = arith.constant 0 : i32
    %c0_i32_0 = arith.constant 0 : i32
    return %arg0, %arg1, %c0_i32 : i32, i32, i32
  }
}

</mosaic_0001>

<llo_original>
// kernel: tpu_custom_call.1
$region0: #{tpu_custom_call.1}
  #allocation0 [shape = 'u32[]', space=smem, size = 0x4, offset = 0x4, fixed_abs, tag = 'smem constant byte address 0x4 - core index']
  #allocation1 [shape = 'u32[144,128]{1,0:T(1,128)}', space=vmem, size = 0x12000, scoped, tag = 'internal scratch']
  #allocation2 [shape = 'f32[16,128]{1,0:T(8,128)}', space=vmem, size = 0x2000, scoped, tag = 'scratch operand']
  %s0 = inlined_call_operand.hbm [shape: bf16[16,128], index: 0, kind: input, shape index: {}]
  %s1 = inlined_call_operand.hbm [shape: bf16[128,128], index: 1, kind: input, shape index: {}]
  %s2 = inlined_call_operand.vmem [shape: f32[1,128], index: 2, kind: input, shape index: {}]
  %s3 = inlined_call_operand.vmem [shape: f32[1,128], index: 3, kind: input, shape index: {}]
  %s4 = inlined_call_operand.vmem [shape: f32[1,16,1], index: 4, kind: output, shape index: {}]
  %s5 = sld [smem:[#allocation0]]
  $region42: #{tpu_custom_call.1} parent=0
    _
  %s7 = ssub.s32 1, %s5
  %s8 = scalar_select 0, %s7, %s5
  $region1: #{tpu_custom_call.1} parent=0
    #allocation3 [shape = 'u8[4096]{0}', space=vmem, size = 0x1000, scoped, tag = 'input window, operand 0, single buffered']
    #allocation4 [shape = 's32[1]{0}', space=sflag, size = 0x4, scoped, tag = 'scoped memory for tpu_custom_call.1']
    #allocation5 [shape = 'u8[32768]{0}', space=vmem, size = 0x8000, scoped, tag = 'input window, operand 1, single buffered']
    #allocation6 [shape = 's32[1]{0}', space=sflag, size = 0x4, scoped, tag = 'scoped memory for tpu_custom_call.1']
    %9 = vsyncpa [#allocation4], 0
    %10 = vsyncpa [#allocation6], 0
    // Predicated region
    $region2: #{tpu_custom_call.1} parent=1 // pred_check
      _
    $region3: #{tpu_custom_call.1} parent=1 // pred_check_branch
      %12 = sbr.rel (0) target = $region5
    $region4: #{tpu_custom_call.1} parent=1 // pred_region
      %s14 = ssub.s32 128, 128
      %15 = vsyncadd [#allocation4], %s14
      %s16 = sshll.u32 [#allocation3], 4
      %s17 = int_to_ptr.vmem [resolvable:$true] %s16
      %22 = dma.hbm_to_vmem [thread:$0]  %s0, 128, %s17, [#allocation4], 64, 64, 4
    $region5: #{tpu_custom_call.1} parent=1 // pred_fallthru
      _
    // Predicated region
    $region6: #{tpu_custom_call.1} parent=1 // pred_check
      _
    $region7: #{tpu_custom_call.1} parent=1 // pred_check_branch
      %24 = sbr.rel (0) target = $region9
    $region8: #{tpu_custom_call.1} parent=1 // pred_region
      %s25 = sadd.s32 0, 0
      %s27 = ssub.s32 1024, 1024
      %28 = vsyncadd [#allocation6], %s27
      %s29 = smul.addr %s25, 64
      %s30 = scalar_lea.hbm %s1, %s29
      %s31 = sshll.u32 [#allocation5], 4
      %s32 = int_to_ptr.vmem [resolvable:$true] %s31
      %37 = dma.hbm_to_vmem [thread:$0]  %s30, 1024, %s32, [#allocation6], 64, 64, 4
    $region9: #{tpu_custom_call.1} parent=1 // pred_fallthru
      _
    // Predicated region
    $region10: #{tpu_custom_call.1} parent=1 // pred_check
      _
    $region11: #{tpu_custom_call.1} parent=1 // pred_check_branch
      %39 = sbr.rel (0) target = $region13
    $region12: #{tpu_custom_call.1} parent=1 // pred_region
      %s40 = sadd.s32 0, 0
      %p41 = scmp.lt.s32.totalorder %s40, 0
      %s42 = scalar_select %p41, %s40, 0
      %s43 = scalar_lea.vmem %s2, %s42
      %s44 = sadd.s32 0, 0
    $region13: #{tpu_custom_call.1} parent=1 // pred_fallthru
      _
    // Predicated region
    $region14: #{tpu_custom_call.1} parent=1 // pred_check
      _
    $region15: #{tpu_custom_call.1} parent=1 // pred_check_branch
      %46 = sbr.rel (0) target = $region17
    $region16: #{tpu_custom_call.1} parent=1 // pred_region
      %s47 = sadd.s32 0, 0
      %p48 = scmp.lt.s32.totalorder %s47, 0
      %s49 = scalar_select %p48, %s47, 0
      %s50 = scalar_lea.vmem %s3, %s49
      %s51 = sadd.s32 0, 0
    $region17: #{tpu_custom_call.1} parent=1 // pred_fallthru
      _
    // Predicated region
    $region18: #{tpu_custom_call.1} parent=1 // pred_check
      _
    $region19: #{tpu_custom_call.1} parent=1 // pred_check_branch
      %53 = sbr.rel (0) target = $region21
    $region20: #{tpu_custom_call.1} parent=1 // pred_region
      %54 = dma.done [#allocation4], 128
    $region21: #{tpu_custom_call.1} parent=1 // pred_fallthru
      _
    // Predicated region
    $region22: #{tpu_custom_call.1} parent=1 // pred_check
      _
    $region23: #{tpu_custom_call.1} parent=1 // pred_check_branch
      %56 = sbr.rel (0) target = $region25
    $region24: #{tpu_custom_call.1} parent=1 // pred_region
      %57 = dma.done [#allocation6], 1024
    $region25: #{tpu_custom_call.1} parent=1 // pred_fallthru
      _
    %s58 = sadd.s32 0, 0
    %p59 = scmp.lt.s32.totalorder %s58, 0
    %s60 = scalar_select %p59, %s58, 0
    %s61 = scalar_lea.vmem %s2, %s60
    %s62 = sadd.s32 0, 0
    %p63 = scmp.lt.s32.totalorder %s62, 0
    %s64 = scalar_select %p63, %s62, 0
    %s65 = scalar_lea.vmem %s3, %s64
    %s66 = sadd.s32 0, 0
    %s67 = sadd.s32 0, 0
    %p68 = scmp.lt.s32.totalorder %s67, 0
    %s69 = scalar_select %p68, %s67, 0
    %s70 = scalar_lea.vmem %s2, %s69
    %s71 = sadd.s32 0, 0
    %s72 = sadd.s32 0, 0
    %p73 = scmp.lt.s32.totalorder %s72, 0
    %s74 = scalar_select %p73, %s72, 0
    %s75 = scalar_lea.vmem %s3, %s74
    %s76 = sadd.s32 0, 0
    %p78 = scmp.eq.s32.totalorder 0, 0
    // Predicated region
    $region26: #{tpu_custom_call.1} parent=1 // pred_check
      %p79 = pneg %p78
    $region27: #{tpu_custom_call.1} parent=1 // pred_check_branch
      %81 = sbr.rel (%p79) target = $region29
    $region28: #{tpu_custom_call.1} parent=1 // pred_region
      %82 = vst [vmem:[#allocation2] sm:$0xff] 0.0
      %83 = vst [vmem:[#allocation2 + $0x8] sm:$0xff] 0.0
    $region29: #{tpu_custom_call.1} parent=1 // pred_fallthru
      _
    %v84 = vld [vmem:[#allocation3] sm:$0xf]
    %v85 = vld [vmem:[#allocation3 + $0x4] sm:$0xf]
    %v86 = vld [vmem:[#allocation5] sm:$0xf]
    %v87 = vld [vmem:[#allocation5 + $0x4] sm:$0xf]
    %v88 = vld [vmem:[#allocation5 + $0x8] sm:$0xf]
    %v89 = vld [vmem:[#allocation5 + $0xc] sm:$0xf]
    %v90 = vld [vmem:[#allocation5 + $0x10] sm:$0xf]
    %v91 = vld [vmem:[#allocation5 + $0x14] sm:$0xf]
    %v92 = vld [vmem:[#allocation5 + $0x18] sm:$0xf]
    %v93 = vld [vmem:[#allocation5 + $0x1c] sm:$0xf]
    %v94 = vld [vmem:[#allocation5 + $0x20] sm:$0xf]
    %v95 = vld [vmem:[#allocation5 + $0x24] sm:$0xf]
    %v96 = vld [vmem:[#allocation5 + $0x28] sm:$0xf]
    %v97 = vld [vmem:[#allocation5 + $0x2c] sm:$0xf]
    %v98 = vld [vmem:[#allocation5 + $0x30] sm:$0xf]
    %v99 = vld [vmem:[#allocation5 + $0x34] sm:$0xf]
    %v100 = vld [vmem:[#allocation5 + $0x38] sm:$0xf]
    %v101 = vld [vmem:[#allocation5 + $0x3c] sm:$0xf]
    %v102 = vld [vmem:[%s70] sm:$0x1]
    %v104 = vlaneseq
    %v105 = vshrl.u32 %v104, 7
    %v106 = vsub.s32 0, %v105
    %v107 = vrot.slane %v102, %v106
    %v111 = vunpack.c.l.b16 %v84
    %v112 = vunpack.c.l.b16 %v85
    %v113 = vpack.c.b16 %v112, %v111
    %v131 = vunpack.c.l.b16 %v86
    %v132 = vunpack.c.l.b16 %v87
    %v133 = vunpack.c.l.b16 %v88
    %v134 = vunpack.c.l.b16 %v89
    %v135 = vunpack.c.l.b16 %v90
    %v136 = vunpack.c.l.b16 %v91
    %v137 = vunpack.c.l.b16 %v92
    %v138 = vunpack.c.l.b16 %v93
    %v139 = vunpack.c.l.b16 %v94
    %v140 = vunpack.c.l.b16 %v95
    %v141 = vunpack.c.l.b16 %v96
    %v142 = vunpack.c.l.b16 %v97
    %v143 = vunpack.c.l.b16 %v98
    %v144 = vunpack.c.l.b16 %v99
    %v145 = vunpack.c.l.b16 %v100
    %v146 = vunpack.c.l.b16 %v101
    %v147 = vpack.c.b16 %v132, %v131
    %v148 = vpack.c.b16 %v134, %v133
    %v149 = vpack.c.b16 %v136, %v135
    %v150 = vpack.c.b16 %v138, %v137
    %v151 = vpack.c.b16 %v140, %v139
    %v152 = vpack.c.b16 %v142, %v141
    %v153 = vpack.c.b16 %v144, %v143
    %v154 = vpack.c.b16 %v146, %v145
    %163 = vmatprep.subr.bf16.mxu0 0
    %164 = vmatpush1.bf16.msra.mxu0 %v147
    %165 = vmatprep.subr.bf16.mxu0 0
    %166 = vmatpush1.bf16.msra.mxu0 %v148
    %167 = vmatprep.subr.bf16.mxu0 0
    %168 = vmatpush1.bf16.msra.mxu0 %v149
    %169 = vmatprep.subr.bf16.mxu0 0
    %170 = vmatpush1.bf16.msra.mxu0 %v150
    %171 = vmatprep.subr.bf16.mxu0 0
    %172 = vmatpush1.bf16.msra.mxu0 %v151
    %173 = vmatprep.subr.bf16.mxu0 0
    %174 = vmatpush1.bf16.msra.mxu0 %v152
    %175 = vmatprep.subr.bf16.mxu0 0
    %176 = vmatpush1.bf16.msra.mxu0 %v153
    %177 = vmatprep.subr.bf16.mxu0 0
    %178 = vmatpush1.bf16.msra.mxu0 %v154
    %179 = vmatprep.subr.bf16.mxu0 0
    %180 = vmatpush1.bf16.msra.mxu0 0
    %181 = vmatprep.subr.bf16.mxu0 0
    %182 = vmatpush1.bf16.msra.mxu0 0
    %183 = vmatprep.subr.bf16.mxu0 0
    %184 = vmatpush1.bf16.msra.mxu0 0
    %185 = vmatprep.subr.bf16.mxu0 0
    %186 = vmatpush1.bf16.msra.mxu0 0
    %187 = vmatprep.subr.bf16.mxu0 0
    %188 = vmatpush1.bf16.msra.mxu0 0
    %189 = vmatprep.subr.bf16.mxu0 0
    %190 = vmatpush1.bf16.msra.mxu0 0
    %191 = vmatprep.subr.bf16.mxu0 0
    %192 = vmatpush1.bf16.msra.mxu0 0
    %193 = vmatprep.subr.bf16.mxu0 0
    %194 = vmatpush1.bf16.msra.mxu0 0
    %195 = vmatprep.mubr.bf16.mxu0 0
    %196 = vmatmul.mubr.bf16.gmra.mrb[0].mxu0 %v113
    %v197 = vpop.f32.mrb[0].mxu0
    %v198 = vadd.f32 %v107, %v197
    %v199 = vpop.f32.mrb[0].mxu0
    %v200 = vpop.f32.mrb[0].mxu0
    %v201 = vadd.f32 %v107, %v200
    %v202 = vpop.f32.mrb[0].mxu0
    %203 = vdwg.mxu0
    %v204 = vmul.f32 %v198, 0.2
    %v205 = vmul.f32 %v201, 0.2
    %v206 = vmax.f32 %v198, %v204
    %v207 = vmax.f32 %v201, %v205
    %v208 = vld [vmem:[#allocation2] sm:$0xff]
    %v209 = vld [vmem:[#allocation2 + $0x8] sm:$0xff]
    %v210 = vld [vmem:[%s75] sm:$0x1]
    %v212 = vlaneseq
    %v213 = vshrl.u32 %v212, 7
    %v214 = vsub.s32 0, %v213
    %v215 = vrot.slane %v210, %v214
    %v217 = vmul.f32 %v206, %v215
    %v218 = vmul.f32 %v207, %v215
    %v219 = vadd.f32 %v208, %v217
    %v220 = vadd.f32 %v209, %v218
    %221 = vst [vmem:[#allocation2] sm:$0xff] %v219
    %222 = vst [vmem:[#allocation2 + $0x8] sm:$0xff] %v220
    // Predicated region
    $region30: #{tpu_custom_call.1} parent=1 // pred_check
      %p223 = pneg %p78
    $region31: #{tpu_custom_call.1} parent=1 // pred_check_branch
      %225 = sbr.rel (%p223) target = $region33
    $region32: #{tpu_custom_call.1} parent=1 // pred_region
      %v226 = vld [vmem:[#allocation2] sm:$0xff]
      %v227 = vld [vmem:[#allocation2 + $0x8] sm:$0xff]
      %228 = vadd.xlane.f32.xlu0 %v226
      %v229 = vpop.xlane.xlu0 %228
      %230 = vadd.xlane.f32.xlu0 %v227
      %v231 = vpop.xlane.xlu0 %230
      %vm232 = vcmask 7168
      %233 = vst.msk [vmem:[%s4] sm:$0xff] %vm232, %v229
      %234 = vst.msk [vmem:[%s4 + $0x8] sm:$0xff] %vm232, %v231
    $region33: #{tpu_custom_call.1} parent=1 // pred_fallthru
      _
    // Predicated region
    $region34: #{tpu_custom_call.1} parent=1 // pred_check
      _
    $region35: #{tpu_custom_call.1} parent=1 // pred_check_branch
      %236 = sbr.rel (0) target = $region37
    $region36: #{tpu_custom_call.1} parent=1 // pred_region
      _
    $region37: #{tpu_custom_call.1} parent=1 // pred_fallthru
      _
    // Predicated region
    $region38: #{tpu_custom_call.1} parent=1 // pred_check
      _
    $region39: #{tpu_custom_call.1} parent=1 // pred_check_branch
      %238 = sbr.rel (0) target = $region41
    $region40: #{tpu_custom_call.1} parent=1 // pred_region
      _
    $region41: #{tpu_custom_call.1} parent=1 // pred_fallthru
      _
    %239 = vsyncpa [#allocation4], 1
    %240 = vsyncpa [#allocation6], 1

</llo_original>
